<compile_context>
chip_gen: v7x
topology: tpu7x:2x2x1
jax: 0.10.0
libtpu: 0.0.40
codegen_flags: <defaults>
</compile_context>

<pallas_src>
import functools

import jax
import jax.numpy as jnp
from jax.experimental import pallas as pl
from jax.experimental.pallas import tpu as pltpu

LB_POS = 0.9
LB_NEG = 0.005
LB_IGNORE = 255


def _cdiv(a, b):
    return -(-a // b)


def _rup(a, b):
    return _cdiv(a, b) * b


def _ls_ce_kernel(x_ref, lbl_ref, out_ref, *, hw, tile_hw):
    # x_ref:   (1, C, T) logits tile (positions lane-dense, classes on sublanes)
    # lbl_ref: (1, 1, T) labels (uint8 or int32)
    # out_ref: (1, 1, 2, 128) packed partials: row 0 = loss sum, row 1 = count
    x = x_ref[...].astype(jnp.float32)              # (1, C, T)
    lbl = lbl_ref[...].astype(jnp.int32)            # (1, 1, T)
    c = x.shape[1]
    t = x.shape[2]

    # log-softmax pieces over the (small) class axis = sublane axis
    m = jnp.max(x, axis=1, keepdims=True)           # (1, 1, T)
    z = x - m                                       # (1, C, T)
    lse = jnp.log(jnp.sum(jnp.exp(z), axis=1, keepdims=True))   # (1, 1, T)

    # Fused weighted reduction: w_j = lb_pos where j == label else lb_neg.
    # (1, C, 1) sublane-only iota; broadcast happens inside the compare.
    class_ids = jax.lax.broadcasted_iota(jnp.int32, (1, c, 1), 1)
    w = jnp.where(class_ids == lbl, LB_POS, LB_NEG)              # (1, C, T)
    wz = jnp.sum(w * z, axis=1, keepdims=True)                   # (1, 1, T)

    k_coef = LB_POS + LB_NEG * float(c - 1)
    per_pos = k_coef * lse - wz                                   # (1, 1, T)

    # Validity mask: label != ignore AND position inside the real H*W extent
    # (handles the ragged last tile without any wrapper-side padding; garbage
    # logits in the tail never escape their own lane and are selected away).
    pos = (jax.lax.broadcasted_iota(jnp.int32, (1, 1, t), 2)
           + pl.program_id(1) * tile_hw)
    valid = (lbl != LB_IGNORE) & (pos < hw)
    per_pos = jnp.where(valid, per_pos, 0.0)

    loss_s = jnp.sum(per_pos)
    cnt_s = jnp.sum(valid.astype(jnp.float32))       # exact: < 2^24 per tile

    # Pack both partials into one lane-dense output block.
    sub = jax.lax.broadcasted_iota(jnp.int32, out_ref.shape, 2)
    out_ref[...] = jnp.where(sub == 0, loss_s, cnt_s)


def label_smooth_softmax_ce(logits_nchw, label_nhw, *, block_bytes=6 * 1024 * 1024):
    """reduction='mean' loss.  logits_nchw: (N,C,H,W) float, label_nhw: (N,H,W) int."""
    N, C, H, W = logits_nchw.shape
    HW = H * W

    # Free views; keep native logits dtype (bf16 passes through, upcast in-kernel).
    x = logits_nchw.reshape(N, C, HW)
    lbl_dtype = jnp.uint8 if C <= 255 else jnp.int32     # LB_IGNORE=255 fits uint8
    lbl = label_nhw.reshape(N, 1, HW).astype(lbl_dtype)

    # Tile sized in f32 bytes so in-kernel f32 temporaries are ~block_bytes each.
    max_tile = max(128, (block_bytes // (C * 4)) // 128 * 128)
    hw128 = _rup(HW, 128)
    n_tiles = _cdiv(hw128, max_tile)
    tile_hw = min(max_tile, _rup(_cdiv(HW, n_tiles), 128))
    tiles = _cdiv(HW, tile_hw)
    # v7x megacore: avoid a size-1 parallel grid when the work is splittable.
    if N * tiles == 1 and hw128 >= 256:
        tile_hw = _rup(_cdiv(HW, 2), 128)
        tiles = _cdiv(HW, tile_hw)

    kernel = functools.partial(_ls_ce_kernel, hw=HW, tile_hw=tile_hw)

    parts = pl.pallas_call(
        kernel,
        out_shape=jax.ShapeDtypeStruct((N, tiles, 2, 128), jnp.float32),
        grid_spec=pltpu.PrefetchScalarGridSpec(
            num_scalar_prefetch=0,
            grid=(N, tiles),
            in_specs=[
                pl.BlockSpec((1, C, tile_hw), lambda n, t: (n, 0, t)),
                pl.BlockSpec((1, 1, tile_hw), lambda n, t: (n, 0, t)),
            ],
            out_specs=pl.BlockSpec((1, 1, 2, 128), lambda n, t: (n, t, 0, 0)),
        ),
        compiler_params=pltpu.CompilerParams(
            dimension_semantics=("parallel", "parallel"),
            vmem_limit_bytes=48 * 1024 * 1024,
        ),
    )(x, lbl)

    total_loss = jnp.sum(parts[:, :, 0, 0])
    # Count partials are exact integral f32; sum them as int32 for exactness
    # even when the total valid-pixel count exceeds 2^24.
    n_valid = jnp.sum(parts[:, :, 1, 0].astype(jnp.int32))
    return total_loss / n_valid


def _reference_loss(logits, label):
    """Pure-JAX reference matching the PyTorch module (reduction='mean')."""
    logs = jax.nn.log_softmax(logits, axis=1)
    ignore = label == LB_IGNORE
    n_valid = jnp.sum(jnp.logical_not(ignore))
    lbl0 = jnp.where(ignore, 0, label)
    one_hot = jax.nn.one_hot(lbl0, logits.shape[1], axis=1, dtype=jnp.float32)
    smooth = LB_POS * one_hot + LB_NEG * (1.0 - one_hot)
    smooth = jnp.where(ignore[:, None, :, :], 0.0, smooth)
    return -jnp.sum(jnp.sum(logs * smooth, axis=1)) / n_valid


if __name__ == "__main__":
    key = jax.random.PRNGKey(0)
    k1, k2, k3 = jax.random.split(key, 3)

    # Two shapes: one tile-aligned, one with a ragged H*W tail (exercises the
    # in-kernel position mask that replaced wrapper-side padding).
    for (N, C, H, W) in [(2, 4, 16, 16), (2, 4, 15, 15)]:
        logits = jax.random.normal(k1, (N, C, H, W), dtype=jnp.float32)
        label = jax.random.randint(k2, (N, H, W), 0, C, dtype=jnp.int32)
        # sprinkle some ignore labels to exercise the lb_ignore path
        ign_mask = jax.random.bernoulli(k3, 0.1, (N, H, W))
        label = jnp.where(ign_mask, LB_IGNORE, label)

        loss = jax.block_until_ready(label_smooth_softmax_ce(logits, label))
        expected = _reference_loss(logits, label)
        assert jnp.allclose(loss, expected, rtol=1e-5, atol=1e-5), (
            (N, C, H, W), loss, expected)

    print("KERNEL_OK")
</pallas_src>

<mosaic_0001>
module attributes {stable_mosaic.version = 11 : i64} {
  func.func @_ls_ce_kernel(%arg0: i32, %arg1: i32, %arg2: memref<1x4x256xf32, #tpu.memory_space<vmem>>, %arg3: memref<1x1x256xi8, #tpu.memory_space<vmem>>, %arg4: memref<1x1x2x128xf32, #tpu.memory_space<vmem>>) attributes {dimension_semantics = [#tpu.dimension_semantics<parallel>, #tpu.dimension_semantics<parallel>], iteration_bounds = array<i64: 2, 1>, scalar_prefetch = 0 : i64, scratch_operands = 0 : i64, tpu.core_type = #tpu.core_type<tc>, window_params = [{transform_indices = @transform_0, window_bounds = array<i64: 1, 4, 256>}, {transform_indices = @transform_1, window_bounds = array<i64: 1, 1, 256>}, {transform_indices = @transform_2, window_bounds = array<i64: 1, 1, 2, 128>}]} {
    %c0 = arith.constant 0 : index
    %c0_0 = arith.constant 0 : index
    %c0_1 = arith.constant 0 : index
    %0 = vector.load %arg2[%c0, %c0_0, %c0_1] : memref<1x4x256xf32, #tpu.memory_space<vmem>>, vector<1x4x256xf32>
    %c0_2 = arith.constant 0 : index
    %c0_3 = arith.constant 0 : index
    %c0_4 = arith.constant 0 : index
    %1 = vector.load %arg3[%c0_2, %c0_3, %c0_4] : memref<1x1x256xi8, #tpu.memory_space<vmem>>, vector<1x1x256xi8>
    %2 = arith.extui %1 : vector<1x1x256xi8> to vector<1x1x256xi32>
    %cst = arith.constant dense<0xFF800000> : vector<1x256xf32>
    %3 = vector.multi_reduction <maximumf>, %0, %cst [1] : vector<1x4x256xf32> to vector<1x256xf32>
    %4 = vector.shape_cast %3 : vector<1x256xf32> to vector<1x1x256xf32>
    %5 = vector.broadcast %4 : vector<1x1x256xf32> to vector<1x4x256xf32>
    %6 = arith.subf %0, %5 : vector<1x4x256xf32>
    %7 = math.exp %6 : vector<1x4x256xf32>
    %cst_5 = arith.constant dense<0.000000e+00> : vector<1x256xf32>
    %8 = vector.multi_reduction <add>, %7, %cst_5 [1] : vector<1x4x256xf32> to vector<1x256xf32>
    %9 = vector.shape_cast %8 : vector<1x256xf32> to vector<1x1x256xf32>
    %10 = math.log %9 : vector<1x1x256xf32>
    %11 = tpu.iota {dimensions = array<i32: 1>} : vector<1x4x1xi32>
    %12 = vector.broadcast %11 : vector<1x4x1xi32> to vector<1x4x256xi32>
    %13 = vector.broadcast %2 : vector<1x1x256xi32> to vector<1x4x256xi32>
    %14 = arith.cmpi eq, %12, %13 : vector<1x4x256xi32>
    %cst_6 = arith.constant 0.899999976 : f32
    %cst_7 = arith.constant 5.000000e-03 : f32
    %15 = vector.broadcast %cst_6 : f32 to vector<1x4x256xf32>
    %16 = vector.broadcast %cst_7 : f32 to vector<1x4x256xf32>
    %17 = arith.select %14, %15, %16 : vector<1x4x256xi1>, vector<1x4x256xf32>
    %18 = arith.mulf %17, %6 : vector<1x4x256xf32>
    %cst_8 = arith.constant dense<0.000000e+00> : vector<1x256xf32>
    %19 = vector.multi_reduction <add>, %18, %cst_8 [1] : vector<1x4x256xf32> to vector<1x256xf32>
    %20 = vector.shape_cast %19 : vector<1x256xf32> to vector<1x1x256xf32>
    %cst_9 = arith.constant 9.150000e-01 : f32
    %21 = vector.broadcast %cst_9 : f32 to vector<1x1x256xf32>
    %22 = arith.mulf %21, %10 : vector<1x1x256xf32>
    %23 = arith.subf %22, %20 : vector<1x1x256xf32>
    %24 = tpu.iota {dimensions = array<i32: 2>} : vector<1x1x256xi32>
    %c256_i32 = arith.constant 256 : i32
    %25 = arith.muli %arg1, %c256_i32 : i32
    %26 = vector.broadcast %25 : i32 to vector<1x1x256xi32>
    %27 = arith.addi %24, %26 : vector<1x1x256xi32>
    %c255_i32 = arith.constant 255 : i32
    %28 = vector.broadcast %c255_i32 : i32 to vector<1x1x256xi32>
    %29 = arith.cmpi ne, %2, %28 : vector<1x1x256xi32>
    %c256_i32_10 = arith.constant 256 : i32
    %30 = vector.broadcast %c256_i32_10 : i32 to vector<1x1x256xi32>
    %31 = arith.cmpi slt, %27, %30 : vector<1x1x256xi32>
    %32 = arith.andi %29, %31 : vector<1x1x256xi1>
    %cst_11 = arith.constant 0.000000e+00 : f32
    %33 = vector.broadcast %cst_11 : f32 to vector<1x1x256xf32>
    %34 = arith.select %32, %23, %33 : vector<1x1x256xi1>, vector<1x1x256xf32>
    %35 = vector.shape_cast %34 : vector<1x1x256xf32> to vector<1x1x1x256xf32>
    %cst_12 = arith.constant dense<0.000000e+00> : vector<1xf32>
    %36 = vector.multi_reduction <add>, %35, %cst_12 [1, 2, 3] : vector<1x1x1x256xf32> to vector<1xf32>
    %37 = vector.shape_cast %36 : vector<1xf32> to vector<1x1x1x1xf32>
    %38 = vector.extract %37[0, 0, 0, 0] : f32 from vector<1x1x1x1xf32>
    %39 = arith.extui %32 : vector<1x1x256xi1> to vector<1x1x256xi32>
    %40 = arith.sitofp %39 : vector<1x1x256xi32> to vector<1x1x256xf32>
    %41 = vector.shape_cast %40 : vector<1x1x256xf32> to vector<1x1x1x256xf32>
    %cst_13 = arith.constant dense<0.000000e+00> : vector<1xf32>
    %42 = vector.multi_reduction <add>, %41, %cst_13 [1, 2, 3] : vector<1x1x1x256xf32> to vector<1xf32>
    %43 = vector.shape_cast %42 : vector<1xf32> to vector<1x1x1x1xf32>
    %44 = vector.extract %43[0, 0, 0, 0] : f32 from vector<1x1x1x1xf32>
    %45 = tpu.iota {dimensions = array<i32: 2>} : vector<1x1x2x128xi32>
    %c0_i32 = arith.constant 0 : i32
    %46 = vector.broadcast %c0_i32 : i32 to vector<1x1x2x128xi32>
    %47 = arith.cmpi eq, %45, %46 : vector<1x1x2x128xi32>
    %48 = vector.broadcast %38 : f32 to vector<1x1x2x128xf32>
    %49 = vector.broadcast %44 : f32 to vector<1x1x2x128xf32>
    %50 = arith.select %47, %48, %49 : vector<1x1x2x128xi1>, vector<1x1x2x128xf32>
    %c0_14 = arith.constant 0 : index
    %c0_15 = arith.constant 0 : index
    %c0_16 = arith.constant 0 : index
    %c0_17 = arith.constant 0 : index
    %51 = vector.load %arg4[%c0_14, %c0_15, %c0_16, %c0_17] : memref<1x1x2x128xf32, #tpu.memory_space<vmem>>, vector<1x1x2x128xf32>
    tpu.vector_store %arg4[%c0_14, %c0_15, %c0_16, %c0_17], %50 {strides = array<i32>} : memref<1x1x2x128xf32, #tpu.memory_space<vmem>>, vector<1x1x2x128xf32>,
    return
  }
  func.func @transform_0(%arg0: i32, %arg1: i32) -> (i32, i32, i32) {
    %c0_i32 = arith.constant 0 : i32
    %c0_i32_0 = arith.constant 0 : i32
    return %arg0, %c0_i32, %arg1 : i32, i32, i32
  }
  func.func @transform_1(%arg0: i32, %arg1: i32) -> (i32, i32, i32) {
    %c0_i32 = arith.constant 0 : i32
    %c0_i32_0 = arith.constant 0 : i32
    return %arg0, %c0_i32, %arg1 : i32, i32, i32
  }
  func.func @transform_2(%arg0: i32, %arg1: i32) -> (i32, i32, i32, i32) {
    %c0_i32 = arith.constant 0 : i32
    %c0_i32_0 = arith.constant 0 : i32
    %c0_i32_1 = arith.constant 0 : i32
    return %arg0, %arg1, %c0_i32, %c0_i32_0 : i32, i32, i32, i32
  }
}

</mosaic_0001>

<llo_original>
// kernel: tpu_custom_call.1
$region0: #{tpu_custom_call.1}
  #allocation0 [shape = 'u32[]', space=smem, size = 0x4, offset = 0x4, fixed_abs, tag = 'smem constant byte address 0x4 - core index']
  #allocation1 [shape = 'u32[144,128]{1,0:T(1,128)}', space=vmem, size = 0x12000, scoped, tag = 'internal scratch']
  %s0 = inlined_call_operand.hbm [shape: f32[2,4,256], index: 0, kind: input, shape index: {}]
  %s1 = inlined_call_operand.vmem [shape: u8[2,1,256], index: 1, kind: input, shape index: {}]
  %s2 = inlined_call_operand.hbm [shape: f32[2,1,2,128], index: 2, kind: output, shape index: {}]
  %s3 = sld [smem:[#allocation0]]
  $region45: #{tpu_custom_call.1} parent=0
    _
  %s5 = ssub.s32 1, %s3
  %s6 = scalar_select 0, %s5, %s3
  $region1: #{tpu_custom_call.1} parent=0
    #allocation2 [shape = 'u8[8192]{0}', space=vmem, size = 0x2000, scoped, tag = 'input window, operand 0']
    #allocation3 [shape = 's32[2]{0}', space=sflag, size = 0x8, scoped, tag = 'scoped memory for tpu_custom_call.1']
    #allocation4 [shape = 's32[2]{0}', space=sflag, size = 0x8, scoped, tag = 'scoped memory for tpu_custom_call.1']
    #allocation5 [shape = 'u8[2048]{0}', space=vmem, size = 0x800, scoped, tag = 'output window, operand 0']
    %7 = vsyncpa [#allocation3], 0
    %s8 = scalar_lea.sflag [#allocation3], 1
    %9 = vsyncpa %s8, 0
    %10 = vsyncpa [#allocation4], 0
    %s11 = scalar_lea.sflag [#allocation4], 1
    %12 = vsyncpa %s11, 0
    loop: start=0, step=1, limit=4
    $region2: #{tpu_custom_call.1} parent=1 // loop_pre_header
      _
    $region3: #{tpu_custom_call.1} parent=1 // loop_header
      %s14 = sphi 0, %s18
      %p15 = scmp.ge.s32.totalorder %s14, 4
      %s21 = sphi 0, %s33
      %s22 = sphi 0, %s29
      %s23 = sphi 0, %s21
      %s24 = sphi 0, %s22
      %s25 = sphi 0, %s23
      %s26 = sphi 0, %s24
      %s38 = sphi 0, %s40
      %s41 = sphi 0, %s38
      %s42 = sphi 0, %s41
      %s58 = sphi 0, %s42
      %s66 = sphi 0, %s68
      %s69 = sphi 0, %s66
      %s70 = sphi 0, %s69
      %s86 = sphi 0, %s70
      %s94 = sphi 0, %s96
      %s97 = sphi 0, %s94
      %s98 = sphi 0, %s97
      %s114 = sphi 0, %s98
    $region4: #{tpu_custom_call.1} parent=1 // loop_header_branch
      %17 = sbr.rel (%p15) target = $region8
    $region5: #{tpu_custom_call.1} parent=1 // loop_body
      %s19 = ssub.s32 %s14, 1
      %s20 = ssub.s32 %s14, 2
      %s27 = sadd.s32 1, %s22
      %p28 = scmp.ge.s32.totalorder %s27, 1
      %s29 = scalar_select %p28, 0, %s27
      %s30 = sadd.s32 1, %s21
      %s31 = scalar_select %p28, %s30, %s21
      %p32 = scmp.ge.s32.totalorder %s31, 2
      %s33 = scalar_select %p32, 0, %s31
      %s34 = ssub.s32 %s21, %s33
      %s35 = ssub.s32 %s22, %s29
      %s36 = sor.u32 %s34, %s35
      %p37 = scmp.eq.s32.totalorder %s36, 0
      %s39 = sadd.s32 %s38, 1
      %s40 = scalar_select %p37, %s38, %s39
      %p43 = pneg %p37
      %p44 = scmp.eq.s32.totalorder %s14, 1
      %p45 = por %p43, %p44
      %p46 = scmp.ne.s32.totalorder %s38, %s41
      %p47 = scmp.eq.s32.totalorder %s14, 0
      %p48 = por %p46, %p47
      %p49 = scmp.ne.s32.totalorder %s38, %s41
      %p50 = scmp.eq.s32.totalorder %s19, 1
      %p51 = por %p49, %p50
      %p52 = scmp.ne.s32.totalorder %s41, %s42
      %p53 = scmp.eq.s32.totalorder %s19, 0
      %p54 = por %p52, %p53
      %p55 = scmp.ne.s32.totalorder %s41, %s42
      %p56 = scmp.eq.s32.totalorder %s20, 1
      %p57 = por %p55, %p56
      %p59 = scmp.ne.s32.totalorder %s42, %s58
      %p60 = scmp.eq.s32.totalorder %s20, 0
      %p61 = por %p59, %p60
      %s62 = ssub.s32 %s21, %s33
      %s63 = ssub.s32 %s22, %s29
      %s64 = sor.u32 %s62, %s63
      %p65 = scmp.eq.s32.totalorder %s64, 0
      %s67 = sadd.s32 %s66, 1
      %s68 = scalar_select %p65, %s66, %s67
      %p71 = pneg %p65
      %p72 = scmp.eq.s32.totalorder %s14, 1
      %p73 = por %p71, %p72
      %p74 = scmp.ne.s32.totalorder %s66, %s69
      %p75 = scmp.eq.s32.totalorder %s14, 0
      %p76 = por %p74, %p75
      %p77 = scmp.ne.s32.totalorder %s66, %s69
      %p78 = scmp.eq.s32.totalorder %s19, 1
      %p79 = por %p77, %p78
      %p80 = scmp.ne.s32.totalorder %s69, %s70
      %p81 = scmp.eq.s32.totalorder %s19, 0
      %p82 = por %p80, %p81
      %p83 = scmp.ne.s32.totalorder %s69, %s70
      %p84 = scmp.eq.s32.totalorder %s20, 1
      %p85 = por %p83, %p84
      %p87 = scmp.ne.s32.totalorder %s70, %s86
      %p88 = scmp.eq.s32.totalorder %s20, 0
      %p89 = por %p87, %p88
      %s90 = ssub.s32 %s21, %s33
      %s91 = ssub.s32 %s22, %s29
      %s92 = sor.u32 %s90, %s91
      %p93 = scmp.eq.s32.totalorder %s92, 0
      %s95 = sadd.s32 %s94, 1
      %s96 = scalar_select %p93, %s94, %s95
      %p99 = pneg %p93
      %p100 = scmp.eq.s32.totalorder %s14, 1
      %p101 = por %p99, %p100
      %p102 = scmp.ne.s32.totalorder %s94, %s97
      %p103 = scmp.eq.s32.totalorder %s14, 0
      %p104 = por %p102, %p103
      %p105 = scmp.ne.s32.totalorder %s94, %s97
      %p106 = scmp.eq.s32.totalorder %s19, 1
      %p107 = por %p105, %p106
      %p108 = scmp.ne.s32.totalorder %s97, %s98
      %p109 = scmp.eq.s32.totalorder %s19, 0
      %p110 = por %p108, %p109
      %p111 = scmp.ne.s32.totalorder %s97, %s98
      %p112 = scmp.eq.s32.totalorder %s20, 1
      %p113 = por %p111, %p112
      %p115 = scmp.ne.s32.totalorder %s98, %s114
      %p116 = scmp.eq.s32.totalorder %s20, 0
      %p117 = por %p115, %p116
      %p118 = scmp.le.s32.totalorder 1, %s14
      %p119 = scmp.lt.s32.totalorder %s14, 3
      %p120 = pnand %p118, %p119
      %p121 = pneg %p120
      // Predicated region
      $region9: #{tpu_custom_call.1} parent=5 // pred_check
        _
      $region10: #{tpu_custom_call.1} parent=5 // pred_check_branch
        %123 = sbr.rel (%p120) target = $region12
      $region11: #{tpu_custom_call.1} parent=5 // pred_region
        %s124 = ssub.s32 %s14, 1
      $region12: #{tpu_custom_call.1} parent=5 // pred_fallthru
        _
      %p125 = scmp.lt.s32.totalorder %s14, 2
      // Predicated region
      $region13: #{tpu_custom_call.1} parent=5 // pred_check
        %p126 = pneg %p125
      $region14: #{tpu_custom_call.1} parent=5 // pred_check_branch
        %128 = sbr.rel (%p126) target = $region16
      $region15: #{tpu_custom_call.1} parent=5 // pred_region
        // Predicated region
        $region17: #{tpu_custom_call.1} parent=15 // pred_check
          %p129 = pneg %p48
        $region18: #{tpu_custom_call.1} parent=15 // pred_check_branch
          %131 = sbr.rel (%p129) target = $region20
        $region19: #{tpu_custom_call.1} parent=15 // pred_region
          %s132 = sand.u32 %s38, 1
          %s133 = scalar_lea.sflag [#allocation3], %s132
          %s134 = sand.u32 %s38, 1
          %s135 = smul.addr %s134, 8
          %s136 = scalar_lea.vmem [#allocation2], %s135
          %s137 = smul.u32 2, %s22
          %s139 = ssub.s32 128, 128
          %140 = vsyncadd %s133, %s139
          %s141 = smul.addr %s21, 2
          %s142 = sadd.s32 %s137, %s141
          %s143 = smul.addr %s142, 64
          %s144 = scalar_lea.hbm %s0, %s143
          %s146 = sshll.u32 %s136, 4
          %s147 = int_to_ptr.vmem [resolvable:$true] %s146
          %149 = dma.hbm_to_vmem [thread:$0]  %s144, 128, %s147, %s133
        $region20: #{tpu_custom_call.1} parent=15 // pred_fallthru
          _
        // Predicated region
        $region21: #{tpu_custom_call.1} parent=15 // pred_check
          %p150 = pneg %p76
        $region22: #{tpu_custom_call.1} parent=15 // pred_check_branch
          %152 = sbr.rel (%p150) target = $region24
        $region23: #{tpu_custom_call.1} parent=15 // pred_region
          %s153 = smul.u32 2, %s22
          %p154 = scmp.lt.s32.totalorder %s21, 1
          %s155 = scalar_select %p154, %s21, 1
          %p156 = scmp.lt.s32.totalorder %s153, 1
          %s157 = scalar_select %p156, %s153, 1
          %s158 = smul.addr %s155, 2
          %s159 = sadd.s32 %s157, %s158
          %s160 = scalar_lea.vmem %s1, %s159
          %s161 = smul.u32 2, %s22
        $region24: #{tpu_custom_call.1} parent=15 // pred_fallthru
          _
      $region16: #{tpu_custom_call.1} parent=5 // pred_fallthru
        _
      %p162 = scmp.le.s32.totalorder 1, %s14
      %p163 = scmp.lt.s32.totalorder %s14, 3
      %p164 = pnand %p162, %p163
      %p165 = pneg %p164
      // Predicated region
      $region25: #{tpu_custom_call.1} parent=5 // pred_check
        _
      $region26: #{tpu_custom_call.1} parent=5 // pred_check_branch
        %167 = sbr.rel (%p164) target = $region28
      $region27: #{tpu_custom_call.1} parent=5 // pred_region
        %s168 = ssub.s32 %s14, 1
        %s169 = sand.u32 %s41, 1
        %s170 = scalar_lea.sflag [#allocation3], %s169
        %s171 = sand.u32 %s41, 1
        %s172 = smul.addr %s171, 8
        %s173 = scalar_lea.vmem [#allocation2], %s172
        // Predicated region
        $region29: #{tpu_custom_call.1} parent=27 // pred_check
          %p174 = pneg %p54
        $region30: #{tpu_custom_call.1} parent=27 // pred_check_branch
          %176 = sbr.rel (%p174) target = $region32
        $region31: #{tpu_custom_call.1} parent=27 // pred_region
          %177 = dma.done %s170, 128
        $region32: #{tpu_custom_call.1} parent=27 // pred_fallthru
          _
        %s178 = sand.u32 %s41, 1
        %s179 = scalar_lea.sflag [#allocation3], %s178
        %s180 = sand.u32 %s41, 1
        %s181 = smul.addr %s180, 8
        %s182 = scalar_lea.vmem [#allocation2], %s181
        %p183 = pneg %p54
        %p184 = pneg %p51
        %s185 = smul.u32 2, %s24
        %p186 = scmp.lt.s32.totalorder %s23, 1
        %s187 = scalar_select %p186, %s23, 1
        %p188 = scmp.lt.s32.totalorder %s185, 1
        %s189 = scalar_select %p188, %s185, 1
        %s190 = smul.addr %s187, 2
        %s191 = sadd.s32 %s189, %s190
        %s192 = scalar_lea.vmem %s1, %s191
        %p193 = pneg %p82
        %p194 = pneg %p79
        %p195 = pneg %p110
        %p196 = pneg %p107
        %s197 = sand.u32 %s97, 1
        %s198 = scalar_lea.sflag [#allocation4], %s197
        %s199 = sand.u32 %s97, 1
        %s200 = smul.addr %s199, 2
        %s201 = scalar_lea.vmem [#allocation5], %s200
        %s202 = smul.u32 2, %s24
        %s203 = smul.u32 2, %s24
        %p204 = scmp.lt.s32.totalorder %s23, 1
        %s205 = scalar_select %p204, %s23, 1
        %p206 = scmp.lt.s32.totalorder %s203, 1
        %s207 = scalar_select %p206, %s203, 1
        %s208 = smul.addr %s205, 2
        %s209 = sadd.s32 %s207, %s208
        %s210 = scalar_lea.vmem %s1, %s209
        %s211 = smul.u32 2, %s24
        %v212 = vld [vmem:[%s173] sm:$0xff]
        %v213 = vld [vmem:[%s210] sm:$0x3]
        %v214 = vunpack.c.0.s8 %v213
        %v215 = vand.u32 %v214, 255
        %v217 = vcombine.high %v212, %v212
        %vm219 = vcmask 1043456
        %v220 = vsel %vm219, %v212, -inf
        %v221 = vrot.slane %v220, 4
        %v222 = vmax.f32 %v220, %v221
        %v223 = vrot.slane %v222, 2
        %v224 = vmax.f32 %v222, %v223
        %v225 = vrot.slane %v224, 1
        %v226 = vmax.f32 %v224, %v225
        %v227 = vsel %vm219, %v217, -inf
        %v228 = vrot.slane %v227, 4
        %v229 = vmax.f32 %v227, %v228
        %v230 = vrot.slane %v229, 2
        %v231 = vmax.f32 %v229, %v230
        %v232 = vrot.slane %v231, 1
        %v233 = vmax.f32 %v231, %v232
        %v236 = vcombine.low %v226, %v233
        %v238 = vsub.f32 %v212, %v236
        %v239 = vmul.f32 %v238, 1.442695
        %v240 = vpow.pop %v239
        %v242 = vcombine.high %v240, %v240
        %v244 = vsel %vm219, %v240, 0.0
        %v245 = vrot.slane %v244, 4
        %v246 = vadd.f32 %v244, %v245
        %v247 = vrot.slane %v246, 2
        %v248 = vadd.f32 %v246, %v247
        %v249 = vrot.slane %v248, 1
        %v250 = vadd.f32 %v248, %v249
        %v251 = vsel %vm219, %v242, 0.0
        %v252 = vrot.slane %v251, 4
        %v253 = vadd.f32 %v251, %v252
        %v254 = vrot.slane %v253, 2
        %v255 = vadd.f32 %v253, %v254
        %v256 = vrot.slane %v255, 1
        %v257 = vadd.f32 %v255, %v256
        %v258 = vlog2.pop %v250
        %v259 = vmul.f32 %v258, 0.6931472
        %v260 = vlog2.pop %v257
        %v261 = vmul.f32 %v260, 0.6931472
        %v262 = vlaneseq
        %v263 = vshrl.u32 %v262, 7
        %v264 = vlaneseq
        %v265 = vshrl.u32 %v264, 7
        %v266 = vsub.s32 0, %v265
        %v267 = vrot.slane %v215, %v266
        %v268 = vlaneseq
        %v269 = vshrl.u32 %v268, 7
        %v270 = vsub.s32 4, %v269
        %v271 = vrot.slane %v215, %v270
        %v272 = vlaneseq
        %v273 = vshrl.u32 %v272, 7
        %v274 = vsub.s32 0, %v273
        %v275 = vrot.slane %v267, %v274
        %v276 = vlaneseq
        %v277 = vshrl.u32 %v276, 7
        %v278 = vsub.s32 0, %v277
        %v279 = vrot.slane %v271, %v278
        %vm280 = vcmp.eq.s32.totalorder %v263, %v275
        %vm281 = vcmp.eq.s32.totalorder %v263, %v279
        %v282 = vsel %vm280, 0.9, 0.005
        %v283 = vsel %vm281, 0.9, 0.005
        %v285 = vcombine.high %v238, %v238
        %v287 = vmul.f32 %v282, %v238
        %v288 = vmul.f32 %v283, %v285
        %v289 = vsel %vm219, %v287, 0.0
        %v290 = vrot.slane %v289, 4
        %v291 = vadd.f32 %v289, %v290
        %v292 = vrot.slane %v291, 2
        %v293 = vadd.f32 %v291, %v292
        %v294 = vrot.slane %v293, 1
        %v295 = vadd.f32 %v293, %v294
        %v296 = vsel %vm219, %v288, 0.0
        %v297 = vrot.slane %v296, 4
        %v298 = vadd.f32 %v296, %v297
        %v299 = vrot.slane %v298, 2
        %v300 = vadd.f32 %v298, %v299
        %v301 = vrot.slane %v300, 1
        %v302 = vadd.f32 %v300, %v301
        %v303 = vmul.f32 %v259, 0.915
        %v304 = vmul.f32 %v261, 0.915
        %v305 = vsub.f32 %v303, %v295
        %v306 = vsub.f32 %v304, %v302
        %v307 = vlaneseq
        %v308 = vand.u32 %v307, 127
        %v309 = vadd.s32 %v308, 128
        %s310 = smul.u32 %s24, 256
        %v311 = vstv %s310
        %v312 = vadd.s32 %v308, %v311
        %v313 = vadd.s32 %v309, %v311
        %vm314 = vcmp.ne.s32.totalorder %v215, 255
        %vm315 = vcmp.lt.s32.totalorder %v312, 256
        %vm316 = vcmp.lt.s32.totalorder %v313, 256
        %v317 = vsel %vm315, 1, 0
        %v318 = vsel %vm316, 1, 0
        %v319 = vcombine.low %v317, %v318
        %vm320 = vcmp.ne.s32.totalorder %v319, 0
        %vm321 = vmand %vm314, %vm320
        %v324 = vcombine.low %v305, %v306
        %v326 = vsel %vm321, %v324, 0.0
        %v328 = vlaneseq
        %v329 = vshrl.u32 %v328, 7
        %v330 = vsub.s32 0, %v329
        %v331 = vrot.slane %v326, %v330
        %v332 = vlaneseq
        %v333 = vshrl.u32 %v332, 7
        %v334 = vsub.s32 4, %v333
        %v335 = vrot.slane %v326, %v334
        %vm338 = vcmask 1040384
        %v339 = vsel %vm338, %v331, 0.0
        %v340 = vsel %vm338, %v335, 0.0
        %v341 = vadd.f32 %v339, %v340
        %342 = vadd.xlane.f32.xlu0 %v341
        %v343 = vpop.xlane.xlu0 %342
        %v344 = vrot.slane %v343, 4
        %v345 = vadd.f32 %v343, %v344
        %v346 = vrot.slane %v345, 2
        %v347 = vadd.f32 %v345, %v346
        %v348 = vrot.slane %v347, 1
        %v349 = vadd.f32 %v347, %v348
        %s350 = vtos %v349
        %v351 = vsel %vm321, 1, 0
        %v352 = vcvt.s32.f32 %v351
        %v354 = vlaneseq
        %v355 = vshrl.u32 %v354, 7
        %v356 = vsub.s32 0, %v355
        %v357 = vrot.slane %v352, %v356
        %v358 = vlaneseq
        %v359 = vshrl.u32 %v358, 7
        %v360 = vsub.s32 4, %v359
        %v361 = vrot.slane %v352, %v360
        %v364 = vsel %vm338, %v357, 0.0
        %v365 = vsel %vm338, %v361, 0.0
        %v366 = vadd.f32 %v364, %v365
        %367 = vadd.xlane.f32.xlu0 %v366
        %v368 = vpop.xlane.xlu0 %367
        %v369 = vrot.slane %v368, 4
        %v370 = vadd.f32 %v368, %v369
        %v371 = vrot.slane %v370, 2
        %v372 = vadd.f32 %v370, %v371
        %v373 = vrot.slane %v372, 1
        %v374 = vadd.f32 %v372, %v373
        %s375 = vtos %v374
        %vm376 = vcmp.eq.s32.totalorder %v263, 0
        %v377 = vstv %s350
        %v378 = vstv %s375
        %v379 = vsel %vm376, %v377, %v378
        %380 = vst [vmem:[%s201] sm:$0x3] %v379
        %s381 = sand.u32 %s97, 1
        %s382 = scalar_lea.sflag [#allocation4], %s381
        %s383 = sand.u32 %s97, 1
        %s384 = smul.addr %s383, 2
        %s385 = scalar_lea.vmem [#allocation5], %s384
        // Predicated region
        $region33: #{tpu_custom_call.1} parent=27 // pred_check
          %p386 = pneg %p107
        $region34: #{tpu_custom_call.1} parent=27 // pred_check_branch
          %388 = sbr.rel (%p386) target = $region36
        $region35: #{tpu_custom_call.1} parent=27 // pred_region
          %s390 = ssub.s32 32, 32
          %391 = vsyncadd %s382, %s390
          %s392 = sadd.s32 %s24, %s23
          %s393 = smul.addr %s392, 32
          %s394 = scalar_lea.hbm %s2, %s393
          %s396 = sshll.u32 %s385, 4
          %s397 = int_to_ptr.vmem [resolvable:$true] %s396
          %399 = dma.vmem_to_hbm [thread:$0]  %s397, 32, %s394, %s382
        $region36: #{tpu_custom_call.1} parent=27 // pred_fallthru
          _
      $region28: #{tpu_custom_call.1} parent=5 // pred_fallthru
        _
      %p400 = scmp.le.s32.totalorder 2, %s14
      // Predicated region
      $region37: #{tpu_custom_call.1} parent=5 // pred_check
        %p401 = pneg %p400
      $region38: #{tpu_custom_call.1} parent=5 // pred_check_branch
        %403 = sbr.rel (%p401) target = $region40
      $region39: #{tpu_custom_call.1} parent=5 // pred_region
        %s404 = ssub.s32 %s14, 2
        // Predicated region
        $region41: #{tpu_custom_call.1} parent=39 // pred_check
          %p405 = pneg %p113
        $region42: #{tpu_custom_call.1} parent=39 // pred_check_branch
          %407 = sbr.rel (%p405) target = $region44
        $region43: #{tpu_custom_call.1} parent=39 // pred_region
          %s408 = sand.u32 %s98, 1
          %s409 = scalar_lea.sflag [#allocation4], %s408
          %s410 = sand.u32 %s98, 1
          %s411 = smul.addr %s410, 2
          %s412 = scalar_lea.vmem [#allocation5], %s411
          %413 = dma.done %s409, 32
        $region44: #{tpu_custom_call.1} parent=39 // pred_fallthru
          _
      $region40: #{tpu_custom_call.1} parent=5 // pred_fallthru
        _
    $region6: #{tpu_custom_call.1} parent=1 // loop_footer
      %s18 = sadd.s32 1, %s14
    $region7: #{tpu_custom_call.1} parent=1 // loop_footer_branch
      %13 = sbr.rel target = $region3
    $region8: #{tpu_custom_call.1} parent=1 // loop_exit
      _
    %414 = vsyncpa [#allocation3], 1
    %s415 = scalar_lea.sflag [#allocation3], 1
    %416 = vsyncpa %s415, 1
    %417 = vsyncpa [#allocation4], 1
    %s418 = scalar_lea.sflag [#allocation4], 1
    %419 = vsyncpa %s418, 1

</llo_original>
